<compile_context>
chip_gen: v6e
topology: v6e:2x2x1
jax: 0.10.0
libtpu: 0.0.40
codegen_flags: <defaults>
</compile_context>

<pallas_src>
import functools

import jax
import jax.numpy as jnp
from jax.experimental import pallas as pl
from jax.experimental.pallas import tpu as pltpu


def _round_up(x, m):
    return ((x + m - 1) // m) * m


def _pick_batch_tile(B):
    """Sublane-aligned batch tile; >=2 grid steps when B allows (v7x megacore)."""
    if B <= 8:
        return B                       # single tiny tile (full-dim escape hatch)
    half = (B + 1) // 2
    return min(256, _round_up(half, 8))


def pack_mlp_params(params, dot_dtype=None):
    """One-time layout plumbing (NOT per forward call).

    Returns:
      wpack: (K1 + 2*N_h, W) row-stacked, pre-transposed, zero-padded weights
             [w1 | w2 | w3], stored in the dot dtype.
      bpack: (8, W) f32; rows 0,1,2 hold b1,b2,b3 (zero-padded).
      dims:  (n_in, n_w, n_out) static python ints.
    """
    n_w, n_in = params["w1"].shape
    n_out = params["w3"].shape[0]
    if dot_dtype is None:
        # bf16 at the dot boundary only pays once dims are real (v6e/v7x MXU);
        # keep f32 at toy sizes.
        dot_dtype = jnp.bfloat16 if max(n_in, n_w, n_out) >= 256 else jnp.float32

    K1 = _round_up(n_in, 8)            # sublane-aligned w1 row block
    N_h = _round_up(n_w, 128)          # lane-dense hidden width
    N_o = _round_up(n_out, 128)        # lane-dense output width
    W = max(N_h, N_o)                  # common column count of the pack

    def pad2(a, rows, cols):
        out = jnp.zeros((rows, cols), jnp.float32)
        return out.at[: a.shape[0], : a.shape[1]].set(a.astype(jnp.float32))

    w1t = params["w1"].T               # (n_in, n_w)
    w2t = params["w2"].T               # (n_w,  n_w)
    w3t = params["w3"].T               # (n_w,  n_out)

    wpack = jnp.concatenate(
        [pad2(w1t, K1, W), pad2(w2t, N_h, W), pad2(w3t, N_h, W)], axis=0
    ).astype(dot_dtype)

    bpack = jnp.zeros((8, W), jnp.float32)
    bpack = bpack.at[0, :n_w].set(params["b1"].astype(jnp.float32))
    bpack = bpack.at[1, :n_w].set(params["b2"].astype(jnp.float32))
    bpack = bpack.at[2, :n_out].set(params["b3"].astype(jnp.float32))

    return wpack, bpack, (n_in, n_w, n_out)


@functools.partial(jax.jit, static_argnums=(3,))
def mlp_forward(x, wpack, bpack, dims):
    """x: (B, n_input) float. Returns (B, n_output) float32 logits."""
    n_in, n_w, n_out = dims
    B = x.shape[0]

    K1 = _round_up(n_in, 8)
    N_h = _round_up(n_w, 128)
    N_o = _round_up(n_out, 128)
    off_w2 = K1
    off_w3 = K1 + N_h

    tb = _pick_batch_tile(B)
    grid = (pl.cdiv(B, tb),)

    x = x.astype(jnp.float32)

    def kernel(x_ref, w_ref, b_ref, y_ref):
        # Static, aligned slices of the single packed weight buffer.
        w1 = w_ref[0:n_in, 0:N_h]
        w2 = w_ref[off_w2:off_w2 + N_h, 0:N_h]     # shared across the 3 uses
        w3 = w_ref[off_w3:off_w3 + N_h, 0:N_o]
        bblk = b_ref[...]                          # (8, W) f32
        b1 = bblk[0:1, 0:N_h]
        b2 = bblk[1:2, 0:N_h]
        b3 = bblk[2:3, 0:N_o]

        xt = x_ref[...]
        h = jnp.dot(xt.astype(w1.dtype), w1,
                    preferred_element_type=jnp.float32) + b1
        h = jnp.maximum(h, 0.0)

        for _ in range(3):                         # static unroll; w2 reused in vregs
            h = jnp.dot(h.astype(w2.dtype), w2,
                        preferred_element_type=jnp.float32) + b2
            h = jnp.maximum(h, 0.0)

        # TODO(synk): nn.Dropout is identity in eval/inference (implemented);
        # training-mode dropout would use pltpu.prng_seed/prng_random_bits.
        y = jnp.dot(h.astype(w3.dtype), w3,
                    preferred_element_type=jnp.float32) + b3
        y_ref[...] = y.astype(y_ref.dtype)

    itemsize = wpack.dtype.itemsize
    flops = 2 * B * (n_in * N_h + 3 * N_h * N_h + N_h * N_o)
    bytes_accessed = (x.size * 4 + wpack.size * itemsize
                      + bpack.size * 4 + B * N_o * 4)
    cost = pl.CostEstimate(flops=flops, transcendentals=0,
                           bytes_accessed=bytes_accessed)

    # VMEM budget: double-buffered x/out tiles + resident weight/bias packs,
    # with headroom; stays well under v7x's 64 MiB physical per-TC VMEM.
    vmem_needed = (2 * tb * n_in * 4 + 2 * tb * N_o * 4
                   + wpack.size * itemsize + bpack.size * 4)
    vmem_limit = int(min(max(vmem_needed + (4 << 20), 16 << 20), 56 << 20))

    y_pad = pl.pallas_call(
        kernel,
        out_shape=jax.ShapeDtypeStruct((B, N_o), jnp.float32),
        grid=grid,
        in_specs=[
            pl.BlockSpec((tb, n_in), lambda i: (i, 0)),
            pl.BlockSpec(wpack.shape, lambda i: (0, 0)),   # resident across steps
            pl.BlockSpec(bpack.shape, lambda i: (0, 0)),   # resident across steps
        ],
        out_specs=pl.BlockSpec((tb, N_o), lambda i: (i, 0)),
        compiler_params=pltpu.CompilerParams(
            dimension_semantics=("parallel",),
            vmem_limit_bytes=vmem_limit),
        cost_estimate=cost,
    )(x, wpack, bpack)

    # Lane-dense padded output -> real n_out columns.
    return y_pad[:, :n_out]


def _reference_forward(x, params):
    """Pure-JAX reference of the PyTorch forward (dropout in eval mode)."""
    h = jax.nn.relu(x @ params["w1"].T + params["b1"])
    for _ in range(3):
        h = jax.nn.relu(h @ params["w2"].T + params["b2"])
    return h @ params["w3"].T + params["b3"]


def make_params(key, n_input, n_weights, n_output):
    """Deterministic init mimicking PyTorch's uniform(-1/sqrt(fan_in), ...)."""
    ks = jax.random.split(key, 6)

    def u(k, shape, fan_in):
        bound = 1.0 / jnp.sqrt(jnp.float32(fan_in))
        return jax.random.uniform(k, shape, jnp.float32, -bound, bound)

    return {
        "w1": u(ks[0], (n_weights, n_input), n_input),
        "b1": u(ks[1], (n_weights,), n_input),
        "w2": u(ks[2], (n_weights, n_weights), n_weights),
        "b2": u(ks[3], (n_weights,), n_weights),
        "w3": u(ks[4], (n_output, n_weights), n_weights),
        "b3": u(ks[5], (n_output,), n_weights),
    }


if __name__ == "__main__":
    B, N_IN, N_W, N_OUT = 2, 16, 32, 8
    key = jax.random.PRNGKey(0)
    k_x, k_p = jax.random.split(key, 2)

    x = jax.random.normal(k_x, (B, N_IN), jnp.float32)
    params = make_params(k_p, N_IN, N_W, N_OUT)

    # One-time layout plumbing (pre-transpose, pad, pack) outside the hot path.
    wpack, bpack, dims = pack_mlp_params(params)

    y = mlp_forward(x, wpack, bpack, dims)
    y = jax.block_until_ready(y)

    y_ref = _reference_forward(x, params)
    assert y.shape == (B, N_OUT)
    assert jnp.allclose(y, y_ref, atol=1e-5, rtol=1e-5), "mismatch vs reference"

    print("KERNEL_OK")
</pallas_src>

<mosaic_0001>
module attributes {stable_mosaic.version = 11 : i64} {
  func.func @kernel(%arg0: i32, %arg1: memref<2x16xf32, #tpu.memory_space<vmem>>, %arg2: memref<272x128xf32, #tpu.memory_space<vmem>>, %arg3: memref<8x128xf32, #tpu.memory_space<vmem>>, %arg4: memref<2x128xf32, #tpu.memory_space<vmem>>) attributes {dimension_semantics = [#tpu.dimension_semantics<parallel>], iteration_bounds = array<i64: 1>, scalar_prefetch = 0 : i64, scratch_operands = 0 : i64, tpu.core_type = #tpu.core_type<tc>, window_params = [{transform_indices = @transform_0, window_bounds = array<i64: 2, 16>}, {pipeline_mode = #tpu.pipeline_mode<synchronous>, transform_indices = @transform_1, window_bounds = array<i64: 272, 128>}, {pipeline_mode = #tpu.pipeline_mode<synchronous>, transform_indices = @transform_2, window_bounds = array<i64: 8, 128>}, {transform_indices = @transform_3, window_bounds = array<i64: 2, 128>}]} {
    %c0 = arith.constant 0 : index
    %c0_0 = arith.constant 0 : index
    %0 = vector.load %arg2[%c0, %c0_0] : memref<272x128xf32, #tpu.memory_space<vmem>>, vector<16x128xf32>
    %c16 = arith.constant 16 : index
    %c0_1 = arith.constant 0 : index
    %1 = vector.load %arg2[%c16, %c0_1] : memref<272x128xf32, #tpu.memory_space<vmem>>, vector<128x128xf32>
    %c144 = arith.constant 144 : index
    %c0_2 = arith.constant 0 : index
    %2 = vector.load %arg2[%c144, %c0_2] : memref<272x128xf32, #tpu.memory_space<vmem>>, vector<128x128xf32>
    %c0_3 = arith.constant 0 : index
    %c0_4 = arith.constant 0 : index
    %3 = vector.load %arg3[%c0_3, %c0_4] : memref<8x128xf32, #tpu.memory_space<vmem>>, vector<8x128xf32>
    %4 = vector.extract_strided_slice %3 {offsets = [0, 0], sizes = [1, 128], strides = [1, 1]} : vector<8x128xf32> to vector<1x128xf32>
    %5 = vector.extract_strided_slice %3 {offsets = [1, 0], sizes = [1, 128], strides = [1, 1]} : vector<8x128xf32> to vector<1x128xf32>
    %6 = vector.extract_strided_slice %3 {offsets = [2, 0], sizes = [1, 128], strides = [1, 1]} : vector<8x128xf32> to vector<1x128xf32>
    %c0_5 = arith.constant 0 : index
    %c0_6 = arith.constant 0 : index
    %7 = vector.load %arg1[%c0_5, %c0_6] : memref<2x16xf32, #tpu.memory_space<vmem>>, vector<2x16xf32>
    %cst = arith.constant dense<0.000000e+00> : vector<2x128xf32>
    %8 = tpu.matmul %7, %0, %cst {dimension_numbers = #tpu.dot_dimension_numbers<[1], [0], [0], [1], [0, 0, 1, 1], [], []>} : vector<2x16xf32>, vector<16x128xf32>, vector<2x128xf32> -> vector<2x128xf32>
    %9 = vector.broadcast %4 : vector<1x128xf32> to vector<2x128xf32>
    %10 = arith.addf %8, %9 : vector<2x128xf32>
    %cst_7 = arith.constant 0.000000e+00 : f32
    %11 = vector.broadcast %cst_7 : f32 to vector<2x128xf32>
    %12 = arith.maximumf %10, %11 : vector<2x128xf32>
    %cst_8 = arith.constant dense<0.000000e+00> : vector<2x128xf32>
    %13 = tpu.matmul %12, %1, %cst_8 {dimension_numbers = #tpu.dot_dimension_numbers<[1], [0], [0], [1], [0, 0, 1, 1], [], []>} : vector<2x128xf32>, vector<128x128xf32>, vector<2x128xf32> -> vector<2x128xf32>
    %14 = vector.broadcast %5 : vector<1x128xf32> to vector<2x128xf32>
    %15 = arith.addf %13, %14 : vector<2x128xf32>
    %cst_9 = arith.constant 0.000000e+00 : f32
    %16 = vector.broadcast %cst_9 : f32 to vector<2x128xf32>
    %17 = arith.maximumf %15, %16 : vector<2x128xf32>
    %cst_10 = arith.constant dense<0.000000e+00> : vector<2x128xf32>
    %18 = tpu.matmul %17, %1, %cst_10 {dimension_numbers = #tpu.dot_dimension_numbers<[1], [0], [0], [1], [0, 0, 1, 1], [], []>} : vector<2x128xf32>, vector<128x128xf32>, vector<2x128xf32> -> vector<2x128xf32>
    %19 = vector.broadcast %5 : vector<1x128xf32> to vector<2x128xf32>
    %20 = arith.addf %18, %19 : vector<2x128xf32>
    %cst_11 = arith.constant 0.000000e+00 : f32
    %21 = vector.broadcast %cst_11 : f32 to vector<2x128xf32>
    %22 = arith.maximumf %20, %21 : vector<2x128xf32>
    %cst_12 = arith.constant dense<0.000000e+00> : vector<2x128xf32>
    %23 = tpu.matmul %22, %1, %cst_12 {dimension_numbers = #tpu.dot_dimension_numbers<[1], [0], [0], [1], [0, 0, 1, 1], [], []>} : vector<2x128xf32>, vector<128x128xf32>, vector<2x128xf32> -> vector<2x128xf32>
    %24 = vector.broadcast %5 : vector<1x128xf32> to vector<2x128xf32>
    %25 = arith.addf %23, %24 : vector<2x128xf32>
    %cst_13 = arith.constant 0.000000e+00 : f32
    %26 = vector.broadcast %cst_13 : f32 to vector<2x128xf32>
    %27 = arith.maximumf %25, %26 : vector<2x128xf32>
    %cst_14 = arith.constant dense<0.000000e+00> : vector<2x128xf32>
    %28 = tpu.matmul %27, %2, %cst_14 {dimension_numbers = #tpu.dot_dimension_numbers<[1], [0], [0], [1], [0, 0, 1, 1], [], []>} : vector<2x128xf32>, vector<128x128xf32>, vector<2x128xf32> -> vector<2x128xf32>
    %29 = vector.broadcast %6 : vector<1x128xf32> to vector<2x128xf32>
    %30 = arith.addf %28, %29 : vector<2x128xf32>
    %c0_15 = arith.constant 0 : index
    %c0_16 = arith.constant 0 : index
    %31 = vector.load %arg4[%c0_15, %c0_16] : memref<2x128xf32, #tpu.memory_space<vmem>>, vector<2x128xf32>
    tpu.vector_store %arg4[%c0_15, %c0_16], %30 {strides = array<i32>} : memref<2x128xf32, #tpu.memory_space<vmem>>, vector<2x128xf32>,
    return
  }
  func.func @transform_0(%arg0: i32) -> (i32, i32) {
    %c0_i32 = arith.constant 0 : i32
    %c0_i32_0 = arith.constant 0 : i32
    return %arg0, %c0_i32 : i32, i32
  }
  func.func @transform_1(%arg0: i32) -> (i32, i32) {
    %c0_i32 = arith.constant 0 : i32
    %c0_i32_0 = arith.constant 0 : i32
    %c0_i32_1 = arith.constant 0 : i32
    return %c0_i32, %c0_i32_0 : i32, i32
  }
  func.func @transform_2(%arg0: i32) -> (i32, i32) {
    %c0_i32 = arith.constant 0 : i32
    %c0_i32_0 = arith.constant 0 : i32
    %c0_i32_1 = arith.constant 0 : i32
    return %c0_i32, %c0_i32_0 : i32, i32
  }
  func.func @transform_3(%arg0: i32) -> (i32, i32) {
    %c0_i32 = arith.constant 0 : i32
    %c0_i32_0 = arith.constant 0 : i32
    return %arg0, %c0_i32 : i32, i32
  }
}

</mosaic_0001>

<llo_original>
// kernel: mlp_forward.1
$region0: #{mlp_forward.1}
  #allocation0 [shape = 'u32[]', space=smem, size = 0x4, offset = 0x4, fixed_abs, tag = 'smem constant byte address 0x4 - core index']
  #allocation1 [shape = 'u32[144,128]{1,0:T(1,128)}', space=vmem, size = 0x12000, scoped, tag = 'internal scratch']
  %s0 = inlined_call_operand.hbm [shape: f32[2,16], index: 0, kind: input, shape index: {}]
  %s1 = inlined_call_operand.hbm [shape: f32[272,128], index: 1, kind: input, shape index: {}]
  %s2 = inlined_call_operand.hbm [shape: f32[8,128], index: 2, kind: input, shape index: {}]
  %s3 = inlined_call_operand.hbm [shape: f32[2,128], index: 3, kind: output, shape index: {}]
  %s4 = sld [smem:[#allocation0]]
  $region34: #{mlp_forward.1} parent=0
    _
  %s6 = ssub.s32 1, %s4
  %s7 = scalar_select 0, %s6, %s4
  $region1: #{mlp_forward.1} parent=0
    #allocation2 [shape = 'u8[1024]{0}', space=vmem, size = 0x400, scoped, tag = 'input window, operand 0, single buffered']
    #allocation3 [shape = 's32[1]{0}', space=sflag, size = 0x4, scoped, tag = 'scoped memory for mlp_forward.1']
    #allocation4 [shape = 's32[1]{0}', space=sflag, size = 0x4, scoped, tag = 'scoped memory for mlp_forward.1']
    #allocation5 [shape = 'u8[139264]{0}', space=vmem, size = 0x22000, scoped, tag = 'input window, operand 1, single buffered']
    #allocation6 [shape = 's32[1]{0}', space=sflag, size = 0x4, scoped, tag = 'scoped memory for mlp_forward.1']
    #allocation7 [shape = 'u8[4096]{0}', space=vmem, size = 0x1000, scoped, tag = 'input window, operand 2, single buffered']
    #allocation8 [shape = 'u8[1024]{0}', space=vmem, size = 0x400, scoped, tag = 'output window, operand 0, single buffered']
    %8 = vsyncpa [#allocation3], 0
    %9 = vsyncpa [#allocation6], 0
    %10 = vsyncpa [#allocation4], 0
    // Predicated region
    $region2: #{mlp_forward.1} parent=1 // pred_check
      _
    $region3: #{mlp_forward.1} parent=1 // pred_check_branch
      %12 = sbr.rel (0) target = $region5
    $region4: #{mlp_forward.1} parent=1 // pred_region
      %s14 = ssub.s32 32, 32
      %15 = vsyncadd [#allocation3], %s14
      %s17 = sshll.u32 [#allocation2], 4
      %s18 = int_to_ptr.vmem [resolvable:$true] %s17
      %20 = dma.hbm_to_vmem [thread:$0]  %s0, 32, %s18, [#allocation3]
    $region5: #{mlp_forward.1} parent=1 // pred_fallthru
      _
    // Predicated region
    $region6: #{mlp_forward.1} parent=1 // pred_check
      _
    $region7: #{mlp_forward.1} parent=1 // pred_check_branch
      %22 = sbr.rel (0) target = $region9
    $region8: #{mlp_forward.1} parent=1 // pred_region
      %s24 = ssub.s32 4352, 4352
      %25 = vsyncadd [#allocation6], %s24
      %s26 = sshll.u32 [#allocation5], 4
      %s27 = int_to_ptr.vmem [resolvable:$true] %s26
      %32 = dma.hbm_to_vmem [thread:$0]  %s1, 4352, %s27, [#allocation6], 128, 128, 8
    $region9: #{mlp_forward.1} parent=1 // pred_fallthru
      _
    // Predicated region
    $region10: #{mlp_forward.1} parent=1 // pred_check
      _
    $region11: #{mlp_forward.1} parent=1 // pred_check_branch
      %34 = sbr.rel (0) target = $region13
    $region12: #{mlp_forward.1} parent=1 // pred_region
      %s36 = ssub.s32 128, 128
      %37 = vsyncadd [#allocation6], %s36
      %s39 = sshll.u32 [#allocation7], 4
      %s40 = int_to_ptr.vmem [resolvable:$true] %s39
      %42 = dma.hbm_to_vmem [thread:$0]  %s2, 128, %s40, [#allocation6]
    $region13: #{mlp_forward.1} parent=1 // pred_fallthru
      _
    // Predicated region
    $region14: #{mlp_forward.1} parent=1 // pred_check
      _
    $region15: #{mlp_forward.1} parent=1 // pred_check_branch
      %44 = sbr.rel (0) target = $region17
    $region16: #{mlp_forward.1} parent=1 // pred_region
      %45 = dma.done [#allocation3], 32
    $region17: #{mlp_forward.1} parent=1 // pred_fallthru
      _
    // Predicated region
    $region18: #{mlp_forward.1} parent=1 // pred_check
      _
    $region19: #{mlp_forward.1} parent=1 // pred_check_branch
      %47 = sbr.rel (0) target = $region21
    $region20: #{mlp_forward.1} parent=1 // pred_region
      %48 = dma.done [#allocation6], 4352
    $region21: #{mlp_forward.1} parent=1 // pred_fallthru
      _
    // Predicated region
    $region22: #{mlp_forward.1} parent=1 // pred_check
      _
    $region23: #{mlp_forward.1} parent=1 // pred_check_branch
      %50 = sbr.rel (0) target = $region25
    $region24: #{mlp_forward.1} parent=1 // pred_region
      %51 = dma.done [#allocation6], 128
    $region25: #{mlp_forward.1} parent=1 // pred_fallthru
      _
    %v52 = vld [vmem:[#allocation5] sm:$0xff]
    %v53 = vld [vmem:[#allocation5 + $0x8] sm:$0xff]
    %v54 = vld [vmem:[#allocation5 + $0x10] sm:$0xff]
    %v55 = vld [vmem:[#allocation5 + $0x18] sm:$0xff]
    %v56 = vld [vmem:[#allocation5 + $0x20] sm:$0xff]
    %v57 = vld [vmem:[#allocation5 + $0x28] sm:$0xff]
    %v58 = vld [vmem:[#allocation5 + $0x30] sm:$0xff]
    %v59 = vld [vmem:[#allocation5 + $0x38] sm:$0xff]
    %v60 = vld [vmem:[#allocation5 + $0x40] sm:$0xff]
    %v61 = vld [vmem:[#allocation5 + $0x48] sm:$0xff]
    %v62 = vld [vmem:[#allocation5 + $0x50] sm:$0xff]
    %v63 = vld [vmem:[#allocation5 + $0x58] sm:$0xff]
    %v64 = vld [vmem:[#allocation5 + $0x60] sm:$0xff]
    %v65 = vld [vmem:[#allocation5 + $0x68] sm:$0xff]
    %v66 = vld [vmem:[#allocation5 + $0x70] sm:$0xff]
    %v67 = vld [vmem:[#allocation5 + $0x78] sm:$0xff]
    %v68 = vld [vmem:[#allocation5 + $0x80] sm:$0xff]
    %v69 = vld [vmem:[#allocation5 + $0x88] sm:$0xff]
    %v70 = vld [vmem:[#allocation5 + $0x90] sm:$0xff]
    %v71 = vld [vmem:[#allocation5 + $0x98] sm:$0xff]
    %v72 = vld [vmem:[#allocation5 + $0xa0] sm:$0xff]
    %v73 = vld [vmem:[#allocation5 + $0xa8] sm:$0xff]
    %v74 = vld [vmem:[#allocation5 + $0xb0] sm:$0xff]
    %v75 = vld [vmem:[#allocation5 + $0xb8] sm:$0xff]
    %v76 = vld [vmem:[#allocation5 + $0xc0] sm:$0xff]
    %v77 = vld [vmem:[#allocation5 + $0xc8] sm:$0xff]
    %v78 = vld [vmem:[#allocation5 + $0xd0] sm:$0xff]
    %v79 = vld [vmem:[#allocation5 + $0xd8] sm:$0xff]
    %v80 = vld [vmem:[#allocation5 + $0xe0] sm:$0xff]
    %v81 = vld [vmem:[#allocation5 + $0xe8] sm:$0xff]
    %v82 = vld [vmem:[#allocation5 + $0xf0] sm:$0xff]
    %v83 = vld [vmem:[#allocation5 + $0xf8] sm:$0xff]
    %v84 = vld [vmem:[#allocation5 + $0x100] sm:$0xff]
    %v85 = vld [vmem:[#allocation5 + $0x108] sm:$0xff]
    %v86 = vld [vmem:[#allocation7] sm:$0xff]
    %v87 = vld [vmem:[#allocation2] sm:$0x3]
    %v88 = vlaneseq
    %v89 = vshrl.u32 %v88, 7
    %v90 = vsub.s32 0, %v89
    %v91 = vrot.slane %v86, %v90
    %vm92 = vcmask 130048
    %v94 = vsel %vm92, %v87, 0
    %96 = vmatprep.subr.mxu0 0.0
    %97 = vmatpush1.msra.mxu0 0.0
    %98 = vmatprep.subr.mxu0 0.0
    %99 = vmatpush1.msra.mxu0 0.0
    %100 = vmatprep.subr.mxu0 0.0
    %101 = vmatpush1.msra.mxu0 0.0
    %102 = vmatprep.subr.mxu0 0.0
    %103 = vmatpush1.msra.mxu0 0.0
    %104 = vmatprep.subr.mxu0 0.0
    %105 = vmatpush1.msra.mxu0 0.0
    %106 = vmatprep.subr.mxu0 0.0
    %107 = vmatpush1.msra.mxu0 0.0
    %108 = vmatprep.subr.mxu0 0.0
    %109 = vmatpush1.msra.mxu0 0.0
    %110 = vmatprep.subr.mxu0 0.0
    %111 = vmatpush1.msra.mxu0 0.0
    %112 = vmatprep.subr.mxu0 0.0
    %113 = vmatpush1.msra.mxu0 0.0
    %114 = vmatprep.subr.mxu0 0.0
    %115 = vmatpush1.msra.mxu0 0.0
    %116 = vmatprep.subr.mxu0 0.0
    %117 = vmatpush1.msra.mxu0 0.0
    %118 = vmatprep.subr.mxu0 0.0
    %119 = vmatpush1.msra.mxu0 0.0
    %120 = vmatprep.subr.mxu0 0.0
    %121 = vmatpush1.msra.mxu0 0.0
    %122 = vmatprep.subr.mxu0 0.0
    %123 = vmatpush1.msra.mxu0 0.0
    %124 = vmatprep.subr.mxu0 0.0
    %125 = vmatpush1.msra.mxu0 %v53
    %126 = vmatprep.subr.mxu0 0.0
    %127 = vmatpush1.msra.mxu0 %v52
    %128 = vmatprep.subr.mxu0 0.0
    %129 = vmatpush2.msra.mxu0 0.0
    %130 = vmatprep.subr.mxu0 0.0
    %131 = vmatpush2.msra.mxu0 0.0
    %132 = vmatprep.subr.mxu0 0.0
    %133 = vmatpush2.msra.mxu0 0.0
    %134 = vmatprep.subr.mxu0 0.0
    %135 = vmatpush2.msra.mxu0 0.0
    %136 = vmatprep.subr.mxu0 0.0
    %137 = vmatpush2.msra.mxu0 0.0
    %138 = vmatprep.subr.mxu0 0.0
    %139 = vmatpush2.msra.mxu0 0.0
    %140 = vmatprep.subr.mxu0 0.0
    %141 = vmatpush2.msra.mxu0 0.0
    %142 = vmatprep.subr.mxu0 0.0
    %143 = vmatpush2.msra.mxu0 0.0
    %144 = vmatprep.subr.mxu0 0.0
    %145 = vmatpush2.msra.mxu0 0.0
    %146 = vmatprep.subr.mxu0 0.0
    %147 = vmatpush2.msra.mxu0 0.0
    %148 = vmatprep.subr.mxu0 0.0
    %149 = vmatpush2.msra.mxu0 0.0
    %150 = vmatprep.subr.mxu0 0.0
    %151 = vmatpush2.msra.mxu0 0.0
    %152 = vmatprep.subr.mxu0 0.0
    %153 = vmatpush2.msra.mxu0 0.0
    %154 = vmatprep.subr.mxu0 0.0
    %155 = vmatpush2.msra.mxu0 0.0
    %156 = vmatprep.subr.mxu0 0.0
    %157 = vmatpush2.msra.mxu0 0.0
    %158 = vmatprep.subr.mxu0 0.0
    %159 = vmatpush2.msra.mxu0 0.0
    %160 = vmatprep.mubr.f32.mxu0 0.0
    %161 = vmatmul.mubr.f32.gmra.mxu0 %v94
    %v162 = vpop.f32.mrf.mxu0
    %v163 = vadd.f32 %v91, %v162
    %v164 = vpop.f32.mrf.mxu0
    %165 = vdwg.mxu0
    %v166 = vmax.f32 %v163, 0.0
    %v167 = vlaneseq
    %v168 = vshrl.u32 %v167, 7
    %v169 = vsub.s32 1, %v168
    %v170 = vrot.slane %v86, %v169
    %171 = vmatprep.subr.mxu0 0.0
    %172 = vmatpush1.msra.mxu0 %v69
    %173 = vmatprep.subr.mxu0 0.0
    %174 = vmatpush1.msra.mxu0 %v68
    %175 = vmatprep.subr.mxu0 0.0
    %176 = vmatpush1.msra.mxu0 %v67
    %177 = vmatprep.subr.mxu0 0.0
    %178 = vmatpush1.msra.mxu0 %v66
    %179 = vmatprep.subr.mxu0 0.0
    %180 = vmatpush1.msra.mxu0 %v65
    %181 = vmatprep.subr.mxu0 0.0
    %182 = vmatpush1.msra.mxu0 %v64
    %183 = vmatprep.subr.mxu0 0.0
    %184 = vmatpush1.msra.mxu0 %v63
    %185 = vmatprep.subr.mxu0 0.0
    %186 = vmatpush1.msra.mxu0 %v62
    %187 = vmatprep.subr.mxu0 0.0
    %188 = vmatpush1.msra.mxu0 %v61
    %189 = vmatprep.subr.mxu0 0.0
    %190 = vmatpush1.msra.mxu0 %v60
    %191 = vmatprep.subr.mxu0 0.0
    %192 = vmatpush1.msra.mxu0 %v59
    %193 = vmatprep.subr.mxu0 0.0
    %194 = vmatpush1.msra.mxu0 %v58
    %195 = vmatprep.subr.mxu0 0.0
    %196 = vmatpush1.msra.mxu0 %v57
    %197 = vmatprep.subr.mxu0 0.0
    %198 = vmatpush1.msra.mxu0 %v56
    %199 = vmatprep.subr.mxu0 0.0
    %200 = vmatpush1.msra.mxu0 %v55
    %201 = vmatprep.subr.mxu0 0.0
    %202 = vmatpush1.msra.mxu0 %v54
    %203 = vmatprep.subr.mxu0 0.0
    %204 = vmatpush2.msra.mxu0 0.0
    %205 = vmatprep.subr.mxu0 0.0
    %206 = vmatpush2.msra.mxu0 0.0
    %207 = vmatprep.subr.mxu0 0.0
    %208 = vmatpush2.msra.mxu0 0.0
    %209 = vmatprep.subr.mxu0 0.0
    %210 = vmatpush2.msra.mxu0 0.0
    %211 = vmatprep.subr.mxu0 0.0
    %212 = vmatpush2.msra.mxu0 0.0
    %213 = vmatprep.subr.mxu0 0.0
    %214 = vmatpush2.msra.mxu0 0.0
    %215 = vmatprep.subr.mxu0 0.0
    %216 = vmatpush2.msra.mxu0 0.0
    %217 = vmatprep.subr.mxu0 0.0
    %218 = vmatpush2.msra.mxu0 0.0
    %219 = vmatprep.subr.mxu0 0.0
    %220 = vmatpush2.msra.mxu0 0.0
    %221 = vmatprep.subr.mxu0 0.0
    %222 = vmatpush2.msra.mxu0 0.0
    %223 = vmatprep.subr.mxu0 0.0
    %224 = vmatpush2.msra.mxu0 0.0
    %225 = vmatprep.subr.mxu0 0.0
    %226 = vmatpush2.msra.mxu0 0.0
    %227 = vmatprep.subr.mxu0 0.0
    %228 = vmatpush2.msra.mxu0 0.0
    %229 = vmatprep.subr.mxu0 0.0
    %230 = vmatpush2.msra.mxu0 0.0
    %231 = vmatprep.subr.mxu0 0.0
    %232 = vmatpush2.msra.mxu0 0.0
    %233 = vmatprep.subr.mxu0 0.0
    %234 = vmatpush2.msra.mxu0 0.0
    %235 = vmatprep.mubr.f32.mxu0 0.0
    %236 = vmatmul.mubr.f32.gmra.mxu0 %v166
    %v237 = vpop.f32.mrf.mxu0
    %v238 = vadd.f32 %v170, %v237
    %v239 = vpop.f32.mrf.mxu0
    %240 = vdwg.mxu0
    %v241 = vmax.f32 %v238, 0.0
    %242 = vmatprep.subr.mxu0 0.0
    %243 = vmatpush1.msra.mxu0 %v69
    %244 = vmatprep.subr.mxu0 0.0
    %245 = vmatpush1.msra.mxu0 %v68
    %246 = vmatprep.subr.mxu0 0.0
    %247 = vmatpush1.msra.mxu0 %v67
    %248 = vmatprep.subr.mxu0 0.0
    %249 = vmatpush1.msra.mxu0 %v66
    %250 = vmatprep.subr.mxu0 0.0
    %251 = vmatpush1.msra.mxu0 %v65
    %252 = vmatprep.subr.mxu0 0.0
    %253 = vmatpush1.msra.mxu0 %v64
    %254 = vmatprep.subr.mxu0 0.0
    %255 = vmatpush1.msra.mxu0 %v63
    %256 = vmatprep.subr.mxu0 0.0
    %257 = vmatpush1.msra.mxu0 %v62
    %258 = vmatprep.subr.mxu0 0.0
    %259 = vmatpush1.msra.mxu0 %v61
    %260 = vmatprep.subr.mxu0 0.0
    %261 = vmatpush1.msra.mxu0 %v60
    %262 = vmatprep.subr.mxu0 0.0
    %263 = vmatpush1.msra.mxu0 %v59
    %264 = vmatprep.subr.mxu0 0.0
    %265 = vmatpush1.msra.mxu0 %v58
    %266 = vmatprep.subr.mxu0 0.0
    %267 = vmatpush1.msra.mxu0 %v57
    %268 = vmatprep.subr.mxu0 0.0
    %269 = vmatpush1.msra.mxu0 %v56
    %270 = vmatprep.subr.mxu0 0.0
    %271 = vmatpush1.msra.mxu0 %v55
    %272 = vmatprep.subr.mxu0 0.0
    %273 = vmatpush1.msra.mxu0 %v54
    %274 = vmatprep.subr.mxu0 0.0
    %275 = vmatpush2.msra.mxu0 0.0
    %276 = vmatprep.subr.mxu0 0.0
    %277 = vmatpush2.msra.mxu0 0.0
    %278 = vmatprep.subr.mxu0 0.0
    %279 = vmatpush2.msra.mxu0 0.0
    %280 = vmatprep.subr.mxu0 0.0
    %281 = vmatpush2.msra.mxu0 0.0
    %282 = vmatprep.subr.mxu0 0.0
    %283 = vmatpush2.msra.mxu0 0.0
    %284 = vmatprep.subr.mxu0 0.0
    %285 = vmatpush2.msra.mxu0 0.0
    %286 = vmatprep.subr.mxu0 0.0
    %287 = vmatpush2.msra.mxu0 0.0
    %288 = vmatprep.subr.mxu0 0.0
    %289 = vmatpush2.msra.mxu0 0.0
    %290 = vmatprep.subr.mxu0 0.0
    %291 = vmatpush2.msra.mxu0 0.0
    %292 = vmatprep.subr.mxu0 0.0
    %293 = vmatpush2.msra.mxu0 0.0
    %294 = vmatprep.subr.mxu0 0.0
    %295 = vmatpush2.msra.mxu0 0.0
    %296 = vmatprep.subr.mxu0 0.0
    %297 = vmatpush2.msra.mxu0 0.0
    %298 = vmatprep.subr.mxu0 0.0
    %299 = vmatpush2.msra.mxu0 0.0
    %300 = vmatprep.subr.mxu0 0.0
    %301 = vmatpush2.msra.mxu0 0.0
    %302 = vmatprep.subr.mxu0 0.0
    %303 = vmatpush2.msra.mxu0 0.0
    %304 = vmatprep.subr.mxu0 0.0
    %305 = vmatpush2.msra.mxu0 0.0
    %306 = vmatprep.mubr.f32.mxu0 0.0
    %307 = vmatmul.mubr.f32.gmra.mxu0 %v241
    %v308 = vpop.f32.mrf.mxu0
    %v309 = vadd.f32 %v170, %v308
    %v310 = vpop.f32.mrf.mxu0
    %311 = vdwg.mxu0
    %v312 = vmax.f32 %v309, 0.0
    %313 = vmatprep.subr.mxu0 0.0
    %314 = vmatpush1.msra.mxu0 %v69
    %315 = vmatprep.subr.mxu0 0.0
    %316 = vmatpush1.msra.mxu0 %v68
    %317 = vmatprep.subr.mxu0 0.0
    %318 = vmatpush1.msra.mxu0 %v67
    %319 = vmatprep.subr.mxu0 0.0
    %320 = vmatpush1.msra.mxu0 %v66
    %321 = vmatprep.subr.mxu0 0.0
    %322 = vmatpush1.msra.mxu0 %v65
    %323 = vmatprep.subr.mxu0 0.0
    %324 = vmatpush1.msra.mxu0 %v64
    %325 = vmatprep.subr.mxu0 0.0
    %326 = vmatpush1.msra.mxu0 %v63
    %327 = vmatprep.subr.mxu0 0.0
    %328 = vmatpush1.msra.mxu0 %v62
    %329 = vmatprep.subr.mxu0 0.0
    %330 = vmatpush1.msra.mxu0 %v61
    %331 = vmatprep.subr.mxu0 0.0
    %332 = vmatpush1.msra.mxu0 %v60
    %333 = vmatprep.subr.mxu0 0.0
    %334 = vmatpush1.msra.mxu0 %v59
    %335 = vmatprep.subr.mxu0 0.0
    %336 = vmatpush1.msra.mxu0 %v58
    %337 = vmatprep.subr.mxu0 0.0
    %338 = vmatpush1.msra.mxu0 %v57
    %339 = vmatprep.subr.mxu0 0.0
    %340 = vmatpush1.msra.mxu0 %v56
    %341 = vmatprep.subr.mxu0 0.0
    %342 = vmatpush1.msra.mxu0 %v55
    %343 = vmatprep.subr.mxu0 0.0
    %344 = vmatpush1.msra.mxu0 %v54
    %345 = vmatprep.subr.mxu0 0.0
    %346 = vmatpush2.msra.mxu0 0.0
    %347 = vmatprep.subr.mxu0 0.0
    %348 = vmatpush2.msra.mxu0 0.0
    %349 = vmatprep.subr.mxu0 0.0
    %350 = vmatpush2.msra.mxu0 0.0
    %351 = vmatprep.subr.mxu0 0.0
    %352 = vmatpush2.msra.mxu0 0.0
    %353 = vmatprep.subr.mxu0 0.0
    %354 = vmatpush2.msra.mxu0 0.0
    %355 = vmatprep.subr.mxu0 0.0
    %356 = vmatpush2.msra.mxu0 0.0
    %357 = vmatprep.subr.mxu0 0.0
    %358 = vmatpush2.msra.mxu0 0.0
    %359 = vmatprep.subr.mxu0 0.0
    %360 = vmatpush2.msra.mxu0 0.0
    %361 = vmatprep.subr.mxu0 0.0
    %362 = vmatpush2.msra.mxu0 0.0
    %363 = vmatprep.subr.mxu0 0.0
    %364 = vmatpush2.msra.mxu0 0.0
    %365 = vmatprep.subr.mxu0 0.0
    %366 = vmatpush2.msra.mxu0 0.0
    %367 = vmatprep.subr.mxu0 0.0
    %368 = vmatpush2.msra.mxu0 0.0
    %369 = vmatprep.subr.mxu0 0.0
    %370 = vmatpush2.msra.mxu0 0.0
    %371 = vmatprep.subr.mxu0 0.0
    %372 = vmatpush2.msra.mxu0 0.0
    %373 = vmatprep.subr.mxu0 0.0
    %374 = vmatpush2.msra.mxu0 0.0
    %375 = vmatprep.subr.mxu0 0.0
    %376 = vmatpush2.msra.mxu0 0.0
    %377 = vmatprep.mubr.f32.mxu0 0.0
    %378 = vmatmul.mubr.f32.gmra.mxu0 %v312
    %v379 = vpop.f32.mrf.mxu0
    %v380 = vadd.f32 %v170, %v379
    %v381 = vpop.f32.mrf.mxu0
    %382 = vdwg.mxu0
    %v383 = vmax.f32 %v380, 0.0
    %v384 = vlaneseq
    %v385 = vshrl.u32 %v384, 7
    %v386 = vsub.s32 2, %v385
    %v387 = vrot.slane %v86, %v386
    %388 = vmatprep.subr.mxu0 0.0
    %389 = vmatpush1.msra.mxu0 %v85
    %390 = vmatprep.subr.mxu0 0.0
    %391 = vmatpush1.msra.mxu0 %v84
    %392 = vmatprep.subr.mxu0 0.0
    %393 = vmatpush1.msra.mxu0 %v83
    %394 = vmatprep.subr.mxu0 0.0
    %395 = vmatpush1.msra.mxu0 %v82
    %396 = vmatprep.subr.mxu0 0.0
    %397 = vmatpush1.msra.mxu0 %v81
    %398 = vmatprep.subr.mxu0 0.0
    %399 = vmatpush1.msra.mxu0 %v80
    %400 = vmatprep.subr.mxu0 0.0
    %401 = vmatpush1.msra.mxu0 %v79
    %402 = vmatprep.subr.mxu0 0.0
    %403 = vmatpush1.msra.mxu0 %v78
    %404 = vmatprep.subr.mxu0 0.0
    %405 = vmatpush1.msra.mxu0 %v77
    %406 = vmatprep.subr.mxu0 0.0
    %407 = vmatpush1.msra.mxu0 %v76
    %408 = vmatprep.subr.mxu0 0.0
    %409 = vmatpush1.msra.mxu0 %v75
    %410 = vmatprep.subr.mxu0 0.0
    %411 = vmatpush1.msra.mxu0 %v74
    %412 = vmatprep.subr.mxu0 0.0
    %413 = vmatpush1.msra.mxu0 %v73
    %414 = vmatprep.subr.mxu0 0.0
    %415 = vmatpush1.msra.mxu0 %v72
    %416 = vmatprep.subr.mxu0 0.0
    %417 = vmatpush1.msra.mxu0 %v71
    %418 = vmatprep.subr.mxu0 0.0
    %419 = vmatpush1.msra.mxu0 %v70
    %420 = vmatprep.subr.mxu0 0.0
    %421 = vmatpush2.msra.mxu0 0.0
    %422 = vmatprep.subr.mxu0 0.0
    %423 = vmatpush2.msra.mxu0 0.0
    %424 = vmatprep.subr.mxu0 0.0
    %425 = vmatpush2.msra.mxu0 0.0
    %426 = vmatprep.subr.mxu0 0.0
    %427 = vmatpush2.msra.mxu0 0.0
    %428 = vmatprep.subr.mxu0 0.0
    %429 = vmatpush2.msra.mxu0 0.0
    %430 = vmatprep.subr.mxu0 0.0
    %431 = vmatpush2.msra.mxu0 0.0
    %432 = vmatprep.subr.mxu0 0.0
    %433 = vmatpush2.msra.mxu0 0.0
    %434 = vmatprep.subr.mxu0 0.0
    %435 = vmatpush2.msra.mxu0 0.0
    %436 = vmatprep.subr.mxu0 0.0
    %437 = vmatpush2.msra.mxu0 0.0
    %438 = vmatprep.subr.mxu0 0.0
    %439 = vmatpush2.msra.mxu0 0.0
    %440 = vmatprep.subr.mxu0 0.0
    %441 = vmatpush2.msra.mxu0 0.0
    %442 = vmatprep.subr.mxu0 0.0
    %443 = vmatpush2.msra.mxu0 0.0
    %444 = vmatprep.subr.mxu0 0.0
    %445 = vmatpush2.msra.mxu0 0.0
    %446 = vmatprep.subr.mxu0 0.0
    %447 = vmatpush2.msra.mxu0 0.0
    %448 = vmatprep.subr.mxu0 0.0
    %449 = vmatpush2.msra.mxu0 0.0
    %450 = vmatprep.subr.mxu0 0.0
    %451 = vmatpush2.msra.mxu0 0.0
    %452 = vmatprep.mubr.f32.mxu0 0.0
    %453 = vmatmul.mubr.f32.gmra.mxu0 %v383
    %v454 = vpop.f32.mrf.mxu0
    %v455 = vadd.f32 %v387, %v454
    %v456 = vpop.f32.mrf.mxu0
    %457 = vdwg.mxu0
    %458 = vst [vmem:[#allocation8] sm:$0x3] %v455
    // Predicated region
    $region26: #{mlp_forward.1} parent=1 // pred_check
      _
    $region27: #{mlp_forward.1} parent=1 // pred_check_branch
      %460 = sbr.rel (0) target = $region29
    $region28: #{mlp_forward.1} parent=1 // pred_region
      %s462 = ssub.s32 32, 32
      %463 = vsyncadd [#allocation4], %s462
      %s465 = sshll.u32 [#allocation8], 4
      %s466 = int_to_ptr.vmem [resolvable:$true] %s465
      %468 = dma.vmem_to_hbm [thread:$0]  %s466, 32, %s3, [#allocation4]
    $region29: #{mlp_forward.1} parent=1 // pred_fallthru
      _
    // Predicated region
    $region30: #{mlp_forward.1} parent=1 // pred_check
      _
    $region31: #{mlp_forward.1} parent=1 // pred_check_branch
      %470 = sbr.rel (0) target = $region33
    $region32: #{mlp_forward.1} parent=1 // pred_region
      %471 = dma.done [#allocation4], 32
    $region33: #{mlp_forward.1} parent=1 // pred_fallthru
      _
    %472 = vsyncpa [#allocation3], 1
    %473 = vsyncpa [#allocation6], 1
    %474 = vsyncpa [#allocation4], 1

</llo_original>
